<compile_context>
chip_gen: v5e
topology: v5e:2x2
jax: 0.10.0
libtpu: 0.0.40
codegen_flags: <defaults>
</compile_context>

<pallas_src>
import math
from functools import partial

import jax
import jax.numpy as jnp
from jax.experimental import pallas as pl
from jax.experimental.pallas import tpu as pltpu


def _round_up(x, m):
    return (x + m - 1) // m * m


def _vmem_limit(needed_bytes):
    # generous floor (protects against under-estimation), cap below v7x physical
    return int(min(max(needed_bytes * 3 // 2, 32 * 1024 * 1024),
                   64 * 1024 * 1024))


def _choose_tr(r):
    # >=2 hidden tiles when possible (feeds both v7x TensorCores) while keeping
    # the (In, 4*TR) weight slabs small enough for 64 MiB VMEM double-buffering.
    for tr in (256, 128):
        if r > tr and r % tr == 0:
            return tr
    return r


def _choose_bb(b):
    # batch block: full extent for small batches, otherwise pad to a multiple
    # of 8 and tile by 8 (never carry the full batch in one block).
    if b <= 8:
        return b, b
    return 8, _round_up(b, 8)


# ----------------------------------------------------------------------------
# One-time parameter preprocessing (hoisted out of the per-token forward).
# ----------------------------------------------------------------------------
def _prep_lstm(w_ih, w_hh, b_ih, b_hh, weights_dtype=None):
    four_r, in_dim = w_ih.shape
    r = four_r // 4
    tr = _choose_tr(r)
    nt = r // tr

    def slab(w, d):
        # (4R, d) -> (nt, d, 4*TR) where slab[j][:, g*TR + t] = w[g*R + j*TR + t, :]
        w = w.reshape(4, nt, tr, d)          # [g, j, t, i]
        w = jnp.transpose(w, (1, 3, 0, 2))   # [j, i, g, t]
        return w.reshape(nt, d, 4 * tr)

    wih = slab(w_ih, in_dim)
    whh = slab(w_hh, r)
    b = (b_ih + b_hh).reshape(4, nt, tr)
    b = jnp.transpose(b, (1, 0, 2)).reshape(nt, 1, 4 * tr)
    if weights_dtype is not None:
        wih = wih.astype(weights_dtype)
        whh = whh.astype(weights_dtype)
    return {"wih": wih, "whh": whh, "b": b, "tr": tr}


def _prep_attn(w_h2att, b_h2att, w_alpha, b_alpha, weights_dtype=None):
    a = w_h2att.shape[0]
    wht = jnp.transpose(w_h2att)      # (R, A)
    bh = b_h2att.reshape(1, a)
    wa = w_alpha.reshape(1, a)        # alpha_net weight as a row vector
    ba = b_alpha.reshape(1, 1)
    if weights_dtype is not None:
        wht = wht.astype(weights_dtype)
        wa = wa.astype(weights_dtype)
    return {"wht": wht, "bh": bh, "wa": wa, "ba": ba}


def preprocess_params(raw, weights_dtype=None):
    """Convert raw PyTorch-layout params to kernel layouts. Call once."""
    return {
        "att_lstm": _prep_lstm(*raw["att_lstm"], weights_dtype=weights_dtype),
        "lang_lstm": _prep_lstm(*raw["lang_lstm"], weights_dtype=weights_dtype),
        "ocr_lstm": _prep_lstm(*raw["ocr_lstm"], weights_dtype=weights_dtype),
        "attention": _prep_attn(*raw["attention"], weights_dtype=weights_dtype),
        "attention2": _prep_attn(*raw["attention2"], weights_dtype=weights_dtype),
    }


# ----------------------------------------------------------------------------
# mean over the region axis:  (B, S, D) -> (B, D)  (B- and S-tiled)
# ----------------------------------------------------------------------------
def _mean_kernel(inv_n, f_ref, out_ref, acc_ref):
    s = pl.program_id(1)

    @pl.when(s == 0)
    def _():
        acc_ref[...] = jnp.zeros_like(acc_ref)

    acc_ref[...] += jnp.sum(f_ref[...].astype(jnp.float32), axis=1)

    @pl.when(s == pl.num_programs(1) - 1)
    def _():
        out_ref[...] = (acc_ref[...] * inv_n).astype(out_ref.dtype)


def mean_feats_pallas(feats, *, s_tile_max=512):
    B, S, D = feats.shape
    if S <= s_tile_max:
        s_tile, s_pad = S, S
    else:
        s_tile = s_tile_max
        s_pad = _round_up(S, s_tile)
    BB, b_pad = _choose_bb(B)
    if b_pad != B or s_pad != S:
        feats = jnp.pad(feats, [(0, b_pad - B), (0, s_pad - S), (0, 0)])

    needed = 2 * BB * s_tile * D * feats.dtype.itemsize + 2 * BB * D * 4
    out = pl.pallas_call(
        partial(_mean_kernel, 1.0 / S),
        out_shape=jax.ShapeDtypeStruct((b_pad, D), feats.dtype),
        grid_spec=pltpu.PrefetchScalarGridSpec(
            num_scalar_prefetch=0,
            grid=(b_pad // BB, s_pad // s_tile),
            in_specs=[pl.BlockSpec((BB, s_tile, D), lambda b, s: (b, s, 0))],
            out_specs=pl.BlockSpec((BB, D), lambda b, s: (b, 0)),
            scratch_shapes=[pltpu.VMEM((BB, D), jnp.float32)],
        ),
        compiler_params=pltpu.CompilerParams(
            dimension_semantics=("parallel", "arbitrary"),
            vmem_limit_bytes=_vmem_limit(needed)),
    )(feats)
    return out[:B] if b_pad != B else out


# ----------------------------------------------------------------------------
# LSTMCell (PyTorch gate order i, f, g, o), fused gates, tiled over hidden dim.
# Weight slab layout per hidden tile j: (In, 4*TR) with columns [i|f|g|o].
# ----------------------------------------------------------------------------
def _lstm_cell_kernel(tr, x_ref, h_ref, c_ref, wih_ref, whh_ref, b_ref,
                      h_out_ref, c_out_ref):
    x = x_ref[...]
    h = h_ref[...]
    gates = (jnp.dot(x, wih_ref[...], preferred_element_type=jnp.float32)
             + jnp.dot(h, whh_ref[...], preferred_element_type=jnp.float32)
             + b_ref[...].astype(jnp.float32))

    i_g = jax.nn.sigmoid(gates[:, 0 * tr:1 * tr])
    f_g = jax.nn.sigmoid(gates[:, 1 * tr:2 * tr])
    g_g = jnp.tanh(gates[:, 2 * tr:3 * tr])
    o_g = jax.nn.sigmoid(gates[:, 3 * tr:4 * tr])

    c_new = f_g * c_ref[...].astype(jnp.float32) + i_g * g_g
    h_out_ref[...] = (o_g * jnp.tanh(c_new)).astype(h_out_ref.dtype)
    c_out_ref[...] = c_new.astype(c_out_ref.dtype)


def lstm_cell_pallas(x, h, c, p):
    wih, whh, b, tr = p["wih"], p["whh"], p["b"], p["tr"]
    B, In = x.shape
    R = h.shape[1]
    nt = R // tr

    needed = (2 * (In + R + 1) * 4 * tr * wih.dtype.itemsize
              + 2 * B * (In + R) * x.dtype.itemsize
              + 6 * B * tr * 4)

    h2, c2 = pl.pallas_call(
        partial(_lstm_cell_kernel, tr),
        out_shape=(jax.ShapeDtypeStruct((B, R), h.dtype),
                   jax.ShapeDtypeStruct((B, R), c.dtype)),
        grid_spec=pltpu.PrefetchScalarGridSpec(
            num_scalar_prefetch=0,
            grid=(nt,),
            in_specs=[
                pl.BlockSpec((B, In), lambda j: (0, 0)),
                pl.BlockSpec((B, R), lambda j: (0, 0)),
                pl.BlockSpec((B, tr), lambda j: (0, j)),
                pl.BlockSpec((None, In, 4 * tr), lambda j: (j, 0, 0)),
                pl.BlockSpec((None, R, 4 * tr), lambda j: (j, 0, 0)),
                pl.BlockSpec((None, 1, 4 * tr), lambda j: (j, 0, 0)),
            ],
            out_specs=(pl.BlockSpec((B, tr), lambda j: (0, j)),
                       pl.BlockSpec((B, tr), lambda j: (0, j))),
        ),
        compiler_params=pltpu.CompilerParams(
            dimension_semantics=("parallel",),
            vmem_limit_bytes=_vmem_limit(needed)),
    )(x, h, c, wih, whh, b)
    return h2, c2


# ----------------------------------------------------------------------------
# Fused Attention / Attention2 : flash-style online softmax over S tiles.
#   weight = softmax(alpha_net(tanh(p_att + h2att(h))))  [* mask, renormalized]
#   out    = weight @ feats
# The alpha projection runs on the MXU as a batched M=1 matmul.
# ----------------------------------------------------------------------------
def _attention_kernel(guard_zero, has_mask, *refs):
    if has_mask:
        (h_ref, wht_ref, bh_ref, wa_ref, ba_ref, p_ref, f_ref, mask_ref,
         out_ref, atth_sc, m_sc, l_sc, acc_sc) = refs
    else:
        (h_ref, wht_ref, bh_ref, wa_ref, ba_ref, p_ref, f_ref,
         out_ref, atth_sc, m_sc, l_sc, acc_sc) = refs
        mask_ref = None

    s = pl.program_id(1)  # S-tile (reduction) axis, last in the grid

    @pl.when(s == 0)
    def _():
        atth_sc[...] = (jnp.dot(h_ref[...], wht_ref[...],
                                preferred_element_type=jnp.float32)
                        + bh_ref[...].astype(jnp.float32))
        m_sc[...] = jnp.full_like(m_sc, -jnp.inf)
        l_sc[...] = jnp.zeros_like(l_sc)
        acc_sc[...] = jnp.zeros_like(acc_sc)

    BB = p_ref.shape[0]
    A = p_ref.shape[2]

    # logits for this S tile, (BB, ST):
    #   t   = tanh(p + h2att(h))               (BB, ST, A)
    #   dot = einsum over A on the MXU (batched M=1 matmul, like flash QK^T)
    t = jnp.tanh(p_ref[...].astype(jnp.float32) + atth_sc[...][:, None, :])
    wa_b = jnp.broadcast_to(wa_ref[...].astype(jnp.float32)[None, :, :],
                            (BB, 1, A))
    dot = jnp.einsum("bqa,bsa->bqs", wa_b, t,
                     preferred_element_type=jnp.float32)[:, 0, :]
    dot = dot + ba_ref[...].astype(jnp.float32)

    # online softmax update (masked positions contribute nothing)
    m_new = jnp.maximum(m_sc[...], jnp.max(dot, axis=-1, keepdims=True))
    alpha = jnp.exp(m_sc[...] - m_new)
    pexp = jnp.exp(dot - m_new)
    if has_mask:
        pexp = pexp * mask_ref[...].astype(jnp.float32)

    l_sc[...] = alpha * l_sc[...] + jnp.sum(pexp, axis=-1, keepdims=True)
    feats = f_ref[...]
    contrib = jnp.einsum("bqs,bsd->bqd", pexp[:, None, :].astype(feats.dtype),
                         feats, preferred_element_type=jnp.float32)[:, 0, :]
    acc_sc[...] = alpha * acc_sc[...] + contrib
    m_sc[...] = m_new

    @pl.when(s == pl.num_programs(1) - 1)
    def _():
        denom = l_sc[...]
        if guard_zero:  # Attention2: all-masked row -> denominator 1 -> zeros
            denom = jnp.where(denom == 0.0, 1.0, denom)
        out_ref[...] = (acc_sc[...] / denom).astype(out_ref.dtype)


def attention_pallas(h, feats, p_feats, mask, p, *, guard_zero, s_tile_max=256):
    wht, bh, wa, ba = p["wht"], p["bh"], p["wa"], p["ba"]
    B, S, D = feats.shape
    A = wht.shape[1]
    R = h.shape[1]

    # S tiling
    if S <= s_tile_max:
        s_tile, s_pad = S, S
    else:
        s_tile = s_tile_max
        s_pad = _round_up(S, s_tile)

    # Only stream a mask if one was given, or if S padding requires one.
    has_mask = (mask is not None) or (s_pad != S)
    if has_mask and mask is None:
        mask = jnp.ones((B, S), dtype=jnp.float32)
    if has_mask:
        mask = mask.astype(jnp.float32)

    if s_pad != S:
        pad3 = [(0, 0), (0, s_pad - S), (0, 0)]
        feats = jnp.pad(feats, pad3)
        p_feats = jnp.pad(p_feats, pad3)
        mask = jnp.pad(mask, [(0, 0), (0, s_pad - S)])   # zeros: no contribution

    # B tiling / padding (never carry the full batch in a single block)
    BB, b_pad = _choose_bb(B)
    if b_pad != B:
        h = jnp.pad(h, [(0, b_pad - B), (0, 0)])
        feats = jnp.pad(feats, [(0, b_pad - B), (0, 0), (0, 0)])
        p_feats = jnp.pad(p_feats, [(0, b_pad - B), (0, 0), (0, 0)])
        if has_mask:
            # padded rows fully unmasked -> their (discarded) softmax stays finite
            mask = jnp.pad(mask, [(0, b_pad - B), (0, 0)], constant_values=1.0)

    grid = (b_pad // BB, s_pad // s_tile)

    in_specs = [
        pl.BlockSpec((BB, R), lambda b, s: (b, 0)),              # h
        pl.BlockSpec((R, A), lambda b, s: (0, 0)),               # h2att W^T (resident)
        pl.BlockSpec((1, A), lambda b, s: (0, 0)),               # h2att b
        pl.BlockSpec((1, A), lambda b, s: (0, 0)),               # alpha W
        pl.BlockSpec((1, 1), lambda b, s: (0, 0)),               # alpha b
        pl.BlockSpec((BB, s_tile, A), lambda b, s: (b, s, 0)),   # p_feats
        pl.BlockSpec((BB, s_tile, D), lambda b, s: (b, s, 0)),   # feats
    ]
    args = [h, wht, bh, wa, ba, p_feats, feats]
    if has_mask:
        in_specs.append(pl.BlockSpec((BB, s_tile), lambda b, s: (b, s)))
        args.append(mask)

    needed = (2 * BB * s_tile * (A * p_feats.dtype.itemsize
                                 + D * feats.dtype.itemsize
                                 + (4 if has_mask else 0))
              + (R * A + 3 * A) * wht.dtype.itemsize
              + BB * (A + 2 * D + R + 2) * 4)

    out = pl.pallas_call(
        partial(_attention_kernel, guard_zero, has_mask),
        out_shape=jax.ShapeDtypeStruct((b_pad, D), feats.dtype),
        grid_spec=pltpu.PrefetchScalarGridSpec(
            num_scalar_prefetch=0,
            grid=grid,
            in_specs=in_specs,
            out_specs=pl.BlockSpec((BB, D), lambda b, s: (b, 0)),
            scratch_shapes=[
                pltpu.VMEM((BB, A), jnp.float32),   # h2att(h)
                pltpu.VMEM((BB, 1), jnp.float32),   # running max
                pltpu.VMEM((BB, 1), jnp.float32),   # running sum
                pltpu.VMEM((BB, D), jnp.float32),   # accumulator
            ],
        ),
        compiler_params=pltpu.CompilerParams(
            dimension_semantics=("parallel", "arbitrary"),
            vmem_limit_bytes=_vmem_limit(needed)),
    )(*args)
    return out[:B] if b_pad != B else out


# ----------------------------------------------------------------------------
# TopDownCore.forward  (params must come from preprocess_params)
# ----------------------------------------------------------------------------
def top_down_core_forward(params, xt, fc_feats, att_feats, p_att_feats,
                          ocr_feats, p_ocr_feats, ocr_masks, state,
                          att_masks=None, training=False):
    del fc_feats  # not used by TopDownCore.forward (matches reference)
    h_prev, c_prev = state  # each (3, B, R)

    mean_att = mean_feats_pallas(att_feats)
    att_in = jnp.concatenate([h_prev[1] + h_prev[2], mean_att, xt], axis=1)
    h_att, c_att = lstm_cell_pallas(att_in, h_prev[0], c_prev[0],
                                    params["att_lstm"])

    att = attention_pallas(h_att, att_feats, p_att_feats, att_masks,
                           params["attention"], guard_zero=False)
    h_lang, c_lang = lstm_cell_pallas(jnp.concatenate([att, h_att], axis=1),
                                      h_prev[1], c_prev[1], params["lang_lstm"])

    ocr_att = attention_pallas(h_att, ocr_feats, p_ocr_feats, ocr_masks,
                               params["attention2"], guard_zero=True)
    h_ocr, c_ocr = lstm_cell_pallas(jnp.concatenate([ocr_att, h_att], axis=1),
                                    h_prev[2], c_prev[2], params["ocr_lstm"])

    # TODO(synk): training-mode dropout (stateful RNG) not implemented; eval-mode identity.
    output = h_lang

    new_state = (jnp.stack([h_att, h_lang, h_ocr]),
                 jnp.stack([c_att, c_lang, c_ocr]))
    return output, new_state


# ----------------------------------------------------------------------------
# Demo + pure-JAX reference check
# ----------------------------------------------------------------------------
if __name__ == "__main__":
    B, R, A, E = 2, 32, 32, 24          # batch, rnn_size, att_hid_size, input_encoding
    S_att, S_ocr = 8, 6

    key = jax.random.PRNGKey(0)
    keys = jax.random.split(key, 16)
    ki = iter(keys)
    nk = lambda: next(ki)

    xt = jax.random.normal(nk(), (B, E), dtype=jnp.float32)
    fc_feats = jax.random.normal(nk(), (B, R), dtype=jnp.float32)
    att_feats = jax.random.normal(nk(), (B, S_att, R), dtype=jnp.float32)
    p_att_feats = jax.random.normal(nk(), (B, S_att, A), dtype=jnp.float32)
    ocr_feats = jax.random.normal(nk(), (B, S_ocr, R), dtype=jnp.float32)
    p_ocr_feats = jax.random.normal(nk(), (B, S_ocr, A), dtype=jnp.float32)

    att_masks = jnp.array([[1, 1, 1, 1, 1, 1, 1, 1],
                           [1, 1, 1, 1, 1, 1, 0, 0]], dtype=jnp.float32)
    ocr_masks = jnp.array([[1, 1, 1, 0, 1, 1],
                           [0, 0, 0, 0, 0, 0]], dtype=jnp.float32)  # row 1: Attention2 guard

    h0 = jax.random.normal(nk(), (3, B, R), dtype=jnp.float32) * 0.1
    c0 = jax.random.normal(nk(), (3, B, R), dtype=jnp.float32) * 0.1
    state = (h0, c0)

    def linear_params(k, out_f, in_f):
        k1, k2 = jax.random.split(k)
        bound = 1.0 / math.sqrt(in_f)
        w = jax.random.uniform(k1, (out_f, in_f), minval=-bound, maxval=bound,
                               dtype=jnp.float32)
        b = jax.random.uniform(k2, (out_f,), minval=-bound, maxval=bound,
                               dtype=jnp.float32)
        return w, b

    def lstm_params(k, in_f, hid):
        k1, k2 = jax.random.split(k)
        w_ih, b_ih = linear_params(k1, 4 * hid, in_f)
        w_hh, b_hh = linear_params(k2, 4 * hid, hid)
        return (w_ih, w_hh, b_ih, b_hh)

    def attn_params(k, rnn, hid):
        k1, k2 = jax.random.split(k)
        w_h2att, b_h2att = linear_params(k1, hid, rnn)
        w_alpha, b_alpha = linear_params(k2, 1, hid)
        return (w_h2att, b_h2att, w_alpha, b_alpha)

    raw_params = {
        "att_lstm": lstm_params(nk(), E + 2 * R, R),
        "lang_lstm": lstm_params(nk(), 2 * R, R),
        "ocr_lstm": lstm_params(nk(), 2 * R, R),
        "attention": attn_params(nk(), R, A),
        "attention2": attn_params(nk(), R, A),
    }
    params = preprocess_params(raw_params)   # one-time weight layout prep

    out, (h_new, c_new) = top_down_core_forward(
        params, xt, fc_feats, att_feats, p_att_feats,
        ocr_feats, p_ocr_feats, ocr_masks, state, att_masks=att_masks)
    out = jax.block_until_ready(out)

    # ----------------- pure-JAX reference (mirrors the PyTorch module) -------
    def ref_lstm(x, h, c, p):
        w_ih, w_hh, b_ih, b_hh = p
        gates = x @ w_ih.T + b_ih + h @ w_hh.T + b_hh
        i, f, g, o = jnp.split(gates, 4, axis=1)
        c2 = jax.nn.sigmoid(f) * c + jax.nn.sigmoid(i) * jnp.tanh(g)
        h2 = jax.nn.sigmoid(o) * jnp.tanh(c2)
        return h2, c2

    def ref_attn(h, feats, p_feats, mask, p, guard):
        w_h2att, b_h2att, w_alpha, b_alpha = p
        att_h = h @ w_h2att.T + b_h2att
        dot = jnp.tanh(p_feats + att_h[:, None, :])
        dot = jnp.einsum("bsa,oa->bso", dot, w_alpha)[..., 0] + b_alpha[0]
        w = jax.nn.softmax(dot, axis=1)
        if mask is not None:
            w = w * mask
            ws = jnp.sum(w, axis=1, keepdims=True)
            if guard:
                ws = jnp.where(ws == 0.0, 1.0, ws)
            w = w / ws
        return jnp.einsum("bs,bsd->bd", w, feats)

    mean_att_r = jnp.mean(att_feats, axis=1)
    att_in_r = jnp.concatenate([h0[1] + h0[2], mean_att_r, xt], axis=1)
    rh_att, rc_att = ref_lstm(att_in_r, h0[0], c0[0], raw_params["att_lstm"])
    r_att = ref_attn(rh_att, att_feats, p_att_feats, att_masks,
                     raw_params["attention"], False)
    rh_lang, rc_lang = ref_lstm(jnp.concatenate([r_att, rh_att], axis=1),
                                h0[1], c0[1], raw_params["lang_lstm"])
    r_ocr = ref_attn(rh_att, ocr_feats, p_ocr_feats, ocr_masks,
                     raw_params["attention2"], True)
    rh_ocr, rc_ocr = ref_lstm(jnp.concatenate([r_ocr, rh_att], axis=1),
                              h0[2], c0[2], raw_params["ocr_lstm"])
    ref_out = rh_lang
    ref_h = jnp.stack([rh_att, rh_lang, rh_ocr])
    ref_c = jnp.stack([rc_att, rc_lang, rc_ocr])

    assert out.shape == (B, R)
    for got, want in ((out, ref_out), (h_new, ref_h), (c_new, ref_c)):
        err = float(jnp.max(jnp.abs(got - want)))
        assert jnp.allclose(got, want, atol=1e-4, rtol=1e-4), err

    # extra check: the mask-free attention fast path (no mask streamed)
    att_nm = attention_pallas(rh_att, att_feats, p_att_feats, None,
                              params["attention"], guard_zero=False)
    att_nm = jax.block_until_ready(att_nm)
    r_att_nm = ref_attn(rh_att, att_feats, p_att_feats, None,
                        raw_params["attention"], False)
    assert jnp.allclose(att_nm, r_att_nm, atol=1e-4, rtol=1e-4), float(
        jnp.max(jnp.abs(att_nm - r_att_nm)))

    print("KERNEL_OK")
</pallas_src>

<mosaic_0001>
module attributes {stable_mosaic.version = 11 : i64} {
  func.func @_mean_kernel(%arg0: i32, %arg1: i32, %arg2: memref<2x8x32xf32, #tpu.memory_space<vmem>>, %arg3: memref<2x32xf32, #tpu.memory_space<vmem>>, %arg4: memref<2x32xf32, #tpu.memory_space<vmem>>) attributes {dimension_semantics = [#tpu.dimension_semantics<parallel>, #tpu.dimension_semantics<arbitrary>], iteration_bounds = array<i64: 1, 1>, scalar_prefetch = 0 : i64, scratch_operands = 1 : i64, tpu.core_type = #tpu.core_type<tc>, window_params = [{transform_indices = @transform_0, window_bounds = array<i64: 2, 8, 32>}, {transform_indices = @transform_1, window_bounds = array<i64: 2, 32>}]} {
    %c0_i32 = arith.constant 0 : i32
    %0 = arith.cmpi eq, %arg1, %c0_i32 : i32
    %1 = arith.extui %0 : i1 to i32
    %c0_i32_0 = arith.constant 0 : i32
    %2 = arith.cmpi ne, %1, %c0_i32_0 : i32
    scf.if %2 {
      %cst_9 = arith.constant 0.000000e+00 : f32
      %11 = vector.broadcast %cst_9 : f32 to vector<2x32xf32>
      %c0_10 = arith.constant 0 : index
      %c0_11 = arith.constant 0 : index
      %12 = vector.load %arg4[%c0_10, %c0_11] : memref<2x32xf32, #tpu.memory_space<vmem>>, vector<2x32xf32>
      tpu.vector_store %arg4[%c0_10, %c0_11], %11 {strides = array<i32>} : memref<2x32xf32, #tpu.memory_space<vmem>>, vector<2x32xf32>,
    } else {
    }
    %c0 = arith.constant 0 : index
    %c0_1 = arith.constant 0 : index
    %3 = vector.load %arg4[%c0, %c0_1] : memref<2x32xf32, #tpu.memory_space<vmem>>, vector<2x32xf32>
    %c0_2 = arith.constant 0 : index
    %c0_3 = arith.constant 0 : index
    %c0_4 = arith.constant 0 : index
    %4 = vector.load %arg2[%c0_2, %c0_3, %c0_4] : memref<2x8x32xf32, #tpu.memory_space<vmem>>, vector<2x8x32xf32>
    %cst = arith.constant dense<0.000000e+00> : vector<2x32xf32>
    %5 = vector.multi_reduction <add>, %4, %cst [1] : vector<2x8x32xf32> to vector<2x32xf32>
    %6 = arith.addf %3, %5 : vector<2x32xf32>
    %c0_5 = arith.constant 0 : index
    %c0_6 = arith.constant 0 : index
    %7 = vector.load %arg4[%c0_5, %c0_6] : memref<2x32xf32, #tpu.memory_space<vmem>>, vector<2x32xf32>
    tpu.vector_store %arg4[%c0_5, %c0_6], %6 {strides = array<i32>} : memref<2x32xf32, #tpu.memory_space<vmem>>, vector<2x32xf32>,
    %c0_i32_7 = arith.constant 0 : i32
    %8 = arith.cmpi eq, %arg1, %c0_i32_7 : i32
    %9 = arith.extui %8 : i1 to i32
    %c0_i32_8 = arith.constant 0 : i32
    %10 = arith.cmpi ne, %9, %c0_i32_8 : i32
    scf.if %10 {
      %c0_9 = arith.constant 0 : index
      %c0_10 = arith.constant 0 : index
      %11 = vector.load %arg4[%c0_9, %c0_10] : memref<2x32xf32, #tpu.memory_space<vmem>>, vector<2x32xf32>
      %cst_11 = arith.constant 1.250000e-01 : f32
      %12 = vector.broadcast %cst_11 : f32 to vector<2x32xf32>
      %13 = arith.mulf %11, %12 : vector<2x32xf32>
      %c0_12 = arith.constant 0 : index
      %c0_13 = arith.constant 0 : index
      %14 = vector.load %arg3[%c0_12, %c0_13] : memref<2x32xf32, #tpu.memory_space<vmem>>, vector<2x32xf32>
      tpu.vector_store %arg3[%c0_12, %c0_13], %13 {strides = array<i32>} : memref<2x32xf32, #tpu.memory_space<vmem>>, vector<2x32xf32>,
    } else {
    }
    return
  }
  func.func @transform_0(%arg0: i32, %arg1: i32) -> (i32, i32, i32) {
    %c0_i32 = arith.constant 0 : i32
    %c0_i32_0 = arith.constant 0 : i32
    return %arg0, %arg1, %c0_i32 : i32, i32, i32
  }
  func.func @transform_1(%arg0: i32, %arg1: i32) -> (i32, i32) {
    %c0_i32 = arith.constant 0 : i32
    %c0_i32_0 = arith.constant 0 : i32
    return %arg0, %c0_i32 : i32, i32
  }
}

</mosaic_0001>

<llo_original>
// kernel: tpu_custom_call.1
$region0: #{tpu_custom_call.1}
  #allocation0 [shape = 'u32[]', space=smem, size = 0x4, offset = 0x4, fixed_abs, tag = 'smem constant byte address 0x4 - core index']
  #allocation1 [shape = 'u32[72,128]{1,0:T(1,128)}', space=vmem, size = 0x9000, scoped, tag = 'internal scratch']
  #allocation2 [shape = 'f32[2,32]{1,0:T(2,128)}', space=vmem, size = 0x400, scoped, tag = 'scratch operand']
  %s0 = inlined_call_operand.hbm [shape: f32[2,8,32], index: 0, kind: input, shape index: {}]
  %s1 = inlined_call_operand.hbm [shape: f32[2,32], index: 1, kind: output, shape index: {}]
  %s2 = sld [smem:[#allocation0]]
  $region26: #{tpu_custom_call.1} parent=0
    _
  %s4 = ssub.s32 1, %s2
  %s5 = scalar_select 0, %s4, %s2
  $region1: #{tpu_custom_call.1} parent=0
    #allocation3 [shape = 'u8[8192]{0}', space=vmem, size = 0x2000, scoped, tag = 'input window, operand 0, single buffered']
    #allocation4 [shape = 's32[1]{0}', space=sflag, size = 0x4, scoped, tag = 'scoped memory for tpu_custom_call.1']
    #allocation5 [shape = 's32[1]{0}', space=sflag, size = 0x4, scoped, tag = 'scoped memory for tpu_custom_call.1']
    #allocation6 [shape = 'u8[1024]{0}', space=vmem, size = 0x400, scoped, tag = 'output window, operand 0, single buffered']
    %6 = vsyncpa [#allocation4], 0
    %7 = vsyncpa [#allocation5], 0
    // Predicated region
    $region2: #{tpu_custom_call.1} parent=1 // pred_check
      _
    $region3: #{tpu_custom_call.1} parent=1 // pred_check_branch
      %9 = sbr.rel (0) target = $region5
    $region4: #{tpu_custom_call.1} parent=1 // pred_region
      %11 = vsyncadd [#allocation4], 0
      %s12 = sshll.u32 %s0, 4
      %s13 = int_to_ptr.hbm [resolvable:$true] %s12
      %s14 = sshll.u32 [#allocation3], 4
      %s15 = int_to_ptr.vmem [resolvable:$true] %s14
      %20 = dma.hbm_to_vmem [thread:$0]  %s13, 256, %s15, [#allocation4], 128, 128, 8
    $region5: #{tpu_custom_call.1} parent=1 // pred_fallthru
      _
    // Predicated region
    $region6: #{tpu_custom_call.1} parent=1 // pred_check
      _
    $region7: #{tpu_custom_call.1} parent=1 // pred_check_branch
      %22 = sbr.rel (0) target = $region9
    $region8: #{tpu_custom_call.1} parent=1 // pred_region
      %24 = dma.done [#allocation4], 256
    $region9: #{tpu_custom_call.1} parent=1 // pred_fallthru
      _
    %p25 = scmp.eq.s32.totalorder 0, 0
    // Predicated region
    $region10: #{tpu_custom_call.1} parent=1 // pred_check
      %p26 = pneg %p25
    $region11: #{tpu_custom_call.1} parent=1 // pred_check_branch
      %28 = sbr.rel (%p26) target = $region13
    $region12: #{tpu_custom_call.1} parent=1 // pred_region
      %vm29 = vcmask 254976
      %30 = vst.msk [vmem:[#allocation2] sm:$0x3] %vm29, 0.0
    $region13: #{tpu_custom_call.1} parent=1 // pred_fallthru
      _
    %v31 = vld [vmem:[#allocation2] sm:$0x3]
    %v32 = vld [vmem:[#allocation3] sm:$0xff]
    %v33 = vld [vmem:[#allocation3 + $0x8] sm:$0xff]
    %vm34 = vcmask 261120
    %v35 = vsel %vm34, %v32, 0.0
    %v36 = vrot.slane %v35, 4
    %v37 = vadd.f32 %v35, %v36
    %v38 = vrot.slane %v37, 2
    %v39 = vadd.f32 %v37, %v38
    %v40 = vrot.slane %v39, 1
    %v41 = vadd.f32 %v39, %v40
    %v42 = vsel %vm34, %v33, 0.0
    %v43 = vrot.slane %v42, 4
    %v44 = vadd.f32 %v42, %v43
    %v45 = vrot.slane %v44, 2
    %v46 = vadd.f32 %v44, %v45
    %v47 = vrot.slane %v46, 1
    %v48 = vadd.f32 %v46, %v47
    %vm51 = vcmask 1041409
    %v52 = vsel %vm51, %v48, %v41
    %v54 = vadd.f32 %v31, %v52
    %vm55 = vcmask 254976
    %56 = vst.msk [vmem:[#allocation2] sm:$0x3] %vm55, %v54
    // Predicated region
    $region14: #{tpu_custom_call.1} parent=1 // pred_check
      %p57 = pneg %p25
    $region15: #{tpu_custom_call.1} parent=1 // pred_check_branch
      %59 = sbr.rel (%p57) target = $region17
    $region16: #{tpu_custom_call.1} parent=1 // pred_region
      %v60 = vld [vmem:[#allocation2] sm:$0x3]
      %v61 = vmul.f32 %v60, 0.125
      %62 = vst.msk [vmem:[#allocation6] sm:$0x3] %vm55, %v61
    $region17: #{tpu_custom_call.1} parent=1 // pred_fallthru
      _
    // Predicated region
    $region18: #{tpu_custom_call.1} parent=1 // pred_check
      _
    $region19: #{tpu_custom_call.1} parent=1 // pred_check_branch
      %64 = sbr.rel (0) target = $region21
    $region20: #{tpu_custom_call.1} parent=1 // pred_region
      %66 = vsyncadd [#allocation5], 0
      %s68 = sshll.u32 [#allocation6], 4
      %s69 = int_to_ptr.vmem [resolvable:$true] %s68
      %s70 = sshll.u32 %s1, 4
      %s71 = int_to_ptr.hbm [resolvable:$true] %s70
      %73 = dma.vmem_to_hbm [thread:$0]  %s69, 32, %s71, [#allocation5]
    $region21: #{tpu_custom_call.1} parent=1 // pred_fallthru
      _
    // Predicated region
    $region22: #{tpu_custom_call.1} parent=1 // pred_check
      _
    $region23: #{tpu_custom_call.1} parent=1 // pred_check_branch
      %75 = sbr.rel (0) target = $region25
    $region24: #{tpu_custom_call.1} parent=1 // pred_region
      %77 = dma.done [#allocation5], 32
    $region25: #{tpu_custom_call.1} parent=1 // pred_fallthru
      _
    %78 = vsyncpa [#allocation4], 1
    %79 = vsyncpa [#allocation5], 1

</llo_original>
